<compile_context>
chip_gen: v7x
topology: tpu7x:2x2x1
jax: 0.10.0
libtpu: 0.0.40
codegen_flags: <defaults>
</compile_context>

<pallas_src>
import functools

import jax
import jax.numpy as jnp
from jax import lax
from jax.experimental import pallas as pl
from jax.experimental.pallas import tpu as pltpu


def _round_up(x, m):
    return ((x + m - 1) // m) * m


def _predictor_deep_kernel(x_ref, w1t_ref, b1_ref, w2t_ref, o_ref, *,
                           inv_temp, normalize_temp, use_bf16):
    # x_ref: (TB, inc), w1t_ref: (inc, hid), b1_ref: (1, hid),
    # w2t_ref: (hid, C_pad), o_ref: (TB, C_pad)
    x = x_ref[...]
    w1t = w1t_ref[...]
    if use_bf16:
        x = x.astype(jnp.bfloat16)
        w1t = w1t.astype(jnp.bfloat16)
    else:
        x = x.astype(jnp.float32)
        w1t = w1t.astype(jnp.float32)

    # fc1 on the MXU, f32 accumulation.
    h = jnp.dot(x, w1t, preferred_element_type=jnp.float32)
    h = h + b1_ref[...].astype(jnp.float32)

    if normalize_temp:
        # F.normalize(h, dim=1) with the 1/temp scale folded into the rsqrt:
        # clamp the squared norm at eps^2 = 1e-24 to preserve clamp_min(1e-12).
        sq = jnp.sum(h * h, axis=-1, keepdims=True)
        scale = lax.rsqrt(jnp.maximum(sq, 1e-24)) * inv_temp
        h = h * scale

    w2t = w2t_ref[...]
    if use_bf16:
        h = h.astype(jnp.bfloat16)
        w2t = w2t.astype(jnp.bfloat16)
    else:
        w2t = w2t.astype(jnp.float32)

    out = jnp.dot(h, w2t, preferred_element_type=jnp.float32)
    o_ref[...] = out.astype(o_ref.dtype)


def prepare_predictor_deep_params(w1, b1, w2, *, use_bf16=False):
    """Hoisted per-call weight prep: transpose, lane-pad num_class, optional bf16.

    w1: (hid, inc) PyTorch Linear layout, b1: (hid,), w2: (num_class, hid).
    Returns (w1t, b1_2d, w2t_padded, num_class).
    """
    hid, inc = w1.shape
    num_class, hid2 = w2.shape
    assert hid == hid2
    c_pad = _round_up(max(num_class, 128), 128)
    wdt = jnp.bfloat16 if use_bf16 else jnp.float32

    w1t = jnp.asarray(w1, jnp.float32).T.astype(wdt)            # (inc, hid)
    b1_2d = jnp.asarray(b1, jnp.float32).reshape(1, hid)        # (1, hid)
    w2t = jnp.zeros((hid, c_pad), jnp.float32)
    w2t = w2t.at[:, :num_class].set(jnp.asarray(w2, jnp.float32).T).astype(wdt)
    return w1t, b1_2d, w2t, num_class


def predictor_deep(x, w1t, b1_2d, w2t, num_class, *, temp=0.05,
                   normalize_temp=True, use_bf16=False, block_b=256):
    """x: (B, inc); weights as returned by prepare_predictor_deep_params."""
    B, inc = x.shape
    inc_w, hid = w1t.shape
    hid2, c_pad = w2t.shape
    assert inc == inc_w and hid == hid2 and c_pad % 128 == 0

    # Large batch tiles feed the MXU; clamp for small B and pad ragged batches.
    block_b = max(8, min(block_b, _round_up(B, 8)))
    b_pad = _round_up(B, block_b)
    if b_pad != B:
        x = jnp.pad(x, ((0, b_pad - B), (0, 0)))

    kernel = functools.partial(
        _predictor_deep_kernel,
        inv_temp=1.0 / temp,
        normalize_temp=normalize_temp,
        use_bf16=use_bf16,
    )

    out = pl.pallas_call(
        kernel,
        out_shape=jax.ShapeDtypeStruct((b_pad, c_pad), jnp.float32),
        grid_spec=pltpu.PrefetchScalarGridSpec(
            num_scalar_prefetch=0,
            grid=(b_pad // block_b,),
            in_specs=[
                pl.BlockSpec((block_b, inc), lambda i: (i, 0)),   # x tile
                pl.BlockSpec((inc, hid), lambda i: (0, 0)),       # W1^T (resident)
                pl.BlockSpec((1, hid), lambda i: (0, 0)),         # b1   (resident)
                pl.BlockSpec((hid, c_pad), lambda i: (0, 0)),     # W2^T (resident)
            ],
            out_specs=pl.BlockSpec((block_b, c_pad), lambda i: (i, 0)),
        ),
        compiler_params=pltpu.CompilerParams(
            # Batch axis is independent -> shards across v7x's 2 TensorCores
            # whenever the grid has >= 2 steps.
            dimension_semantics=("parallel",),
            # Explicit budget: covers module-default shapes (inc=4096, hid=512,
            # block_b=256 => ~25 MiB with double-buffered x and weights) while
            # staying below v7x's 64 MiB physical VMEM.
            vmem_limit_bytes=48 * 1024 * 1024,
        ),
    )(x, w1t, b1_2d, w2t)

    return out[:B, :num_class]


def predictor_deep_ref(x, w1, b1, w2, *, temp=0.05, normalize_temp=True):
    x = x.astype(jnp.float32)
    h = x @ w1.T.astype(jnp.float32) + b1.astype(jnp.float32)
    if normalize_temp:
        n = jnp.sqrt(jnp.sum(h * h, axis=1, keepdims=True))
        h = h / jnp.maximum(n, 1e-12)
        return (h @ w2.T.astype(jnp.float32)) / temp
    return h @ w2.T.astype(jnp.float32)


if __name__ == "__main__":
    # Small shapes consistent with the module (fc1 hidden is fixed at 512).
    B, INC, HID, NUM_CLASS = 8, 256, 512, 64
    TEMP = 0.05

    key = jax.random.PRNGKey(0)
    kx, k1, kb, k2 = jax.random.split(key, 4)

    x = jax.random.normal(kx, (B, INC), dtype=jnp.float32)
    # nn.Linear default init: U(-1/sqrt(fan_in), 1/sqrt(fan_in))
    bound1 = 1.0 / (INC ** 0.5)
    w1 = jax.random.uniform(k1, (HID, INC), jnp.float32, -bound1, bound1)
    b1 = jax.random.uniform(kb, (HID,), jnp.float32, -bound1, bound1)
    bound2 = 1.0 / (HID ** 0.5)
    w2 = jax.random.uniform(k2, (NUM_CLASS, HID), jnp.float32, -bound2, bound2)

    # Weight prep hoisted out of the per-call path.
    w1t, b1_2d, w2t, nc = prepare_predictor_deep_params(w1, b1, w2)

    out = predictor_deep(x, w1t, b1_2d, w2t, nc, temp=TEMP)
    out = jax.block_until_ready(out)

    ref = predictor_deep_ref(x, w1, b1, w2, temp=TEMP)
    assert out.shape == (B, NUM_CLASS)
    assert jnp.allclose(out, ref, atol=1e-3, rtol=1e-3), "mismatch vs reference"

    print("KERNEL_OK")
</pallas_src>

<mosaic_0001>
module attributes {stable_mosaic.version = 11 : i64} {
  func.func @_predictor_deep_kernel(%arg0: i32, %arg1: memref<8x256xf32, #tpu.memory_space<vmem>>, %arg2: memref<256x512xf32, #tpu.memory_space<vmem>>, %arg3: memref<1x512xf32, #tpu.memory_space<vmem>>, %arg4: memref<512x128xf32, #tpu.memory_space<vmem>>, %arg5: memref<8x128xf32, #tpu.memory_space<vmem>>) attributes {dimension_semantics = [#tpu.dimension_semantics<parallel>], iteration_bounds = array<i64: 1>, scalar_prefetch = 0 : i64, scratch_operands = 0 : i64, tpu.core_type = #tpu.core_type<tc>, window_params = [{transform_indices = @transform_0, window_bounds = array<i64: 8, 256>}, {pipeline_mode = #tpu.pipeline_mode<synchronous>, transform_indices = @transform_1, window_bounds = array<i64: 256, 512>}, {pipeline_mode = #tpu.pipeline_mode<synchronous>, transform_indices = @transform_2, window_bounds = array<i64: 1, 512>}, {pipeline_mode = #tpu.pipeline_mode<synchronous>, transform_indices = @transform_3, window_bounds = array<i64: 512, 128>}, {transform_indices = @transform_4, window_bounds = array<i64: 8, 128>}]} {
    %c0 = arith.constant 0 : index
    %c0_0 = arith.constant 0 : index
    %0 = vector.load %arg1[%c0, %c0_0] : memref<8x256xf32, #tpu.memory_space<vmem>>, vector<8x256xf32>
    %c0_1 = arith.constant 0 : index
    %c0_2 = arith.constant 0 : index
    %1 = vector.load %arg2[%c0_1, %c0_2] : memref<256x512xf32, #tpu.memory_space<vmem>>, vector<256x512xf32>
    %cst = arith.constant dense<0.000000e+00> : vector<8x512xf32>
    %2 = tpu.matmul %0, %1, %cst {dimension_numbers = #tpu.dot_dimension_numbers<[1], [0], [0], [1], [0, 0, 1, 1], [], []>} : vector<8x256xf32>, vector<256x512xf32>, vector<8x512xf32> -> vector<8x512xf32>
    %c0_3 = arith.constant 0 : index
    %c0_4 = arith.constant 0 : index
    %3 = vector.load %arg3[%c0_3, %c0_4] : memref<1x512xf32, #tpu.memory_space<vmem>>, vector<1x512xf32>
    %4 = vector.broadcast %3 : vector<1x512xf32> to vector<8x512xf32>
    %5 = arith.addf %2, %4 : vector<8x512xf32>
    %6 = arith.mulf %5, %5 : vector<8x512xf32>
    %cst_5 = arith.constant dense<0.000000e+00> : vector<8xf32>
    %7 = vector.multi_reduction <add>, %6, %cst_5 [1] : vector<8x512xf32> to vector<8xf32>
    %8 = vector.shape_cast %7 : vector<8xf32> to vector<8x1xf32>
    %cst_6 = arith.constant 1.000000e-24 : f32
    %9 = vector.broadcast %cst_6 : f32 to vector<8x1xf32>
    %10 = arith.maximumf %8, %9 : vector<8x1xf32>
    %11 = math.rsqrt %10 : vector<8x1xf32>
    %cst_7 = arith.constant 2.000000e+01 : f32
    %12 = vector.broadcast %cst_7 : f32 to vector<8x1xf32>
    %13 = arith.mulf %11, %12 : vector<8x1xf32>
    %14 = vector.broadcast %13 : vector<8x1xf32> to vector<8x512xf32>
    %15 = arith.mulf %5, %14 : vector<8x512xf32>
    %c0_8 = arith.constant 0 : index
    %c0_9 = arith.constant 0 : index
    %16 = vector.load %arg4[%c0_8, %c0_9] : memref<512x128xf32, #tpu.memory_space<vmem>>, vector<512x128xf32>
    %cst_10 = arith.constant dense<0.000000e+00> : vector<8x128xf32>
    %17 = tpu.matmul %15, %16, %cst_10 {dimension_numbers = #tpu.dot_dimension_numbers<[1], [0], [0], [1], [0, 0, 1, 1], [], []>} : vector<8x512xf32>, vector<512x128xf32>, vector<8x128xf32> -> vector<8x128xf32>
    %c0_11 = arith.constant 0 : index
    %c0_12 = arith.constant 0 : index
    %18 = vector.load %arg5[%c0_11, %c0_12] : memref<8x128xf32, #tpu.memory_space<vmem>>, vector<8x128xf32>
    tpu.vector_store %arg5[%c0_11, %c0_12], %17 {strides = array<i32>} : memref<8x128xf32, #tpu.memory_space<vmem>>, vector<8x128xf32>,
    return
  }
  func.func @transform_0(%arg0: i32) -> (i32, i32) {
    %c0_i32 = arith.constant 0 : i32
    %c0_i32_0 = arith.constant 0 : i32
    return %arg0, %c0_i32 : i32, i32
  }
  func.func @transform_1(%arg0: i32) -> (i32, i32) {
    %c0_i32 = arith.constant 0 : i32
    %c0_i32_0 = arith.constant 0 : i32
    %c0_i32_1 = arith.constant 0 : i32
    return %c0_i32, %c0_i32_0 : i32, i32
  }
  func.func @transform_2(%arg0: i32) -> (i32, i32) {
    %c0_i32 = arith.constant 0 : i32
    %c0_i32_0 = arith.constant 0 : i32
    %c0_i32_1 = arith.constant 0 : i32
    return %c0_i32, %c0_i32_0 : i32, i32
  }
  func.func @transform_3(%arg0: i32) -> (i32, i32) {
    %c0_i32 = arith.constant 0 : i32
    %c0_i32_0 = arith.constant 0 : i32
    %c0_i32_1 = arith.constant 0 : i32
    return %c0_i32, %c0_i32_0 : i32, i32
  }
  func.func @transform_4(%arg0: i32) -> (i32, i32) {
    %c0_i32 = arith.constant 0 : i32
    %c0_i32_0 = arith.constant 0 : i32
    return %arg0, %c0_i32 : i32, i32
  }
}

</mosaic_0001>

<llo_original>
// kernel: tpu_custom_call.1
$region0: #{tpu_custom_call.1}
  #allocation0 [shape = 'u32[]', space=smem, size = 0x4, offset = 0x4, fixed_abs, tag = 'smem constant byte address 0x4 - core index']
  #allocation1 [shape = 'u32[144,128]{1,0:T(1,128)}', space=vmem, size = 0x12000, scoped, tag = 'internal scratch']
  %s0 = inlined_call_operand.hbm [shape: f32[8,256], index: 0, kind: input, shape index: {}]
  %s1 = inlined_call_operand.hbm [shape: f32[256,512], index: 1, kind: input, shape index: {}]
  %s2 = inlined_call_operand.vmem [shape: f32[1,512], index: 2, kind: input, shape index: {}]
  %s3 = inlined_call_operand.hbm [shape: f32[512,128], index: 3, kind: input, shape index: {}]
  %s4 = inlined_call_operand.hbm [shape: f32[8,128], index: 4, kind: output, shape index: {}]
  %s5 = sld [smem:[#allocation0]]
  $region38: #{tpu_custom_call.1} parent=0
    _
  %s7 = ssub.s32 1, %s5
  %s8 = scalar_select 0, %s7, %s5
  $region1: #{tpu_custom_call.1} parent=0
    #allocation2 [shape = 'u8[8192]{0}', space=vmem, size = 0x2000, scoped, tag = 'input window, operand 0, single buffered']
    #allocation3 [shape = 's32[1]{0}', space=sflag, size = 0x4, scoped, tag = 'scoped memory for tpu_custom_call.1']
    #allocation4 [shape = 's32[1]{0}', space=sflag, size = 0x4, scoped, tag = 'scoped memory for tpu_custom_call.1']
    #allocation5 [shape = 'u8[524288]{0}', space=vmem, size = 0x80000, scoped, tag = 'input window, operand 1, single buffered']
    #allocation6 [shape = 's32[1]{0}', space=sflag, size = 0x4, scoped, tag = 'scoped memory for tpu_custom_call.1']
    #allocation7 [shape = 'u8[262144]{0}', space=vmem, size = 0x40000, scoped, tag = 'input window, operand 3, single buffered']
    #allocation8 [shape = 'u8[4096]{0}', space=vmem, size = 0x1000, scoped, tag = 'output window, operand 0, single buffered']
    %9 = vsyncpa [#allocation3], 0
    %10 = vsyncpa [#allocation6], 0
    %11 = vsyncpa [#allocation4], 0
    // Predicated region
    $region2: #{tpu_custom_call.1} parent=1 // pred_check
      _
    $region3: #{tpu_custom_call.1} parent=1 // pred_check_branch
      %13 = sbr.rel (0) target = $region5
    $region4: #{tpu_custom_call.1} parent=1 // pred_region
      %s15 = ssub.s32 256, 256
      %16 = vsyncadd [#allocation3], %s15
      %s18 = sshll.u32 [#allocation2], 4
      %s19 = int_to_ptr.vmem [resolvable:$true] %s18
      %21 = dma.hbm_to_vmem [thread:$0]  %s0, 256, %s19, [#allocation3]
    $region5: #{tpu_custom_call.1} parent=1 // pred_fallthru
      _
    // Predicated region
    $region6: #{tpu_custom_call.1} parent=1 // pred_check
      _
    $region7: #{tpu_custom_call.1} parent=1 // pred_check_branch
      %23 = sbr.rel (0) target = $region9
    $region8: #{tpu_custom_call.1} parent=1 // pred_region
      %s25 = ssub.s32 16384, 16384
      %26 = vsyncadd [#allocation6], %s25
      %s27 = sshll.u32 [#allocation5], 4
      %s28 = int_to_ptr.vmem [resolvable:$true] %s27
      %33 = dma.hbm_to_vmem [thread:$0]  %s1, 16384, %s28, [#allocation6], 512, 512, 32
    $region9: #{tpu_custom_call.1} parent=1 // pred_fallthru
      _
    // Predicated region
    $region10: #{tpu_custom_call.1} parent=1 // pred_check
      _
    $region11: #{tpu_custom_call.1} parent=1 // pred_check_branch
      %35 = sbr.rel (0) target = $region13
    $region12: #{tpu_custom_call.1} parent=1 // pred_region
      _
    $region13: #{tpu_custom_call.1} parent=1 // pred_fallthru
      _
    // Predicated region
    $region14: #{tpu_custom_call.1} parent=1 // pred_check
      _
    $region15: #{tpu_custom_call.1} parent=1 // pred_check_branch
      %37 = sbr.rel (0) target = $region17
    $region16: #{tpu_custom_call.1} parent=1 // pred_region
      %s39 = ssub.s32 8192, 8192
      %40 = vsyncadd [#allocation6], %s39
      %s41 = sshll.u32 [#allocation7], 4
      %s42 = int_to_ptr.vmem [resolvable:$true] %s41
      %47 = dma.hbm_to_vmem [thread:$0]  %s3, 8192, %s42, [#allocation6], 128, 128, 8
    $region17: #{tpu_custom_call.1} parent=1 // pred_fallthru
      _
    // Predicated region
    $region18: #{tpu_custom_call.1} parent=1 // pred_check
      _
    $region19: #{tpu_custom_call.1} parent=1 // pred_check_branch
      %49 = sbr.rel (0) target = $region21
    $region20: #{tpu_custom_call.1} parent=1 // pred_region
      %50 = dma.done [#allocation3], 256
    $region21: #{tpu_custom_call.1} parent=1 // pred_fallthru
      _
    // Predicated region
    $region22: #{tpu_custom_call.1} parent=1 // pred_check
      _
    $region23: #{tpu_custom_call.1} parent=1 // pred_check_branch
      %52 = sbr.rel (0) target = $region25
    $region24: #{tpu_custom_call.1} parent=1 // pred_region
      %53 = dma.done [#allocation6], 16384
    $region25: #{tpu_custom_call.1} parent=1 // pred_fallthru
      _
    // Predicated region
    $region26: #{tpu_custom_call.1} parent=1 // pred_check
      _
    $region27: #{tpu_custom_call.1} parent=1 // pred_check_branch
      %55 = sbr.rel (0) target = $region29
    $region28: #{tpu_custom_call.1} parent=1 // pred_region
      %56 = dma.done [#allocation6], 8192
    $region29: #{tpu_custom_call.1} parent=1 // pred_fallthru
      _
    %v57 = vld [vmem:[#allocation2] sm:$0xff]
    %v58 = vld [vmem:[#allocation2 + $0x8] sm:$0xff]
    %v59 = vld [vmem:[#allocation5] sm:$0xff]
    %v60 = vld [vmem:[#allocation5 + $0x8] sm:$0xff]
    %v61 = vld [vmem:[#allocation5 + $0x10] sm:$0xff]
    %v62 = vld [vmem:[#allocation5 + $0x18] sm:$0xff]
    %v63 = vld [vmem:[#allocation5 + $0x20] sm:$0xff]
    %v64 = vld [vmem:[#allocation5 + $0x28] sm:$0xff]
    %v65 = vld [vmem:[#allocation5 + $0x30] sm:$0xff]
    %v66 = vld [vmem:[#allocation5 + $0x38] sm:$0xff]
    %v67 = vld [vmem:[#allocation5 + $0x40] sm:$0xff]
    %v68 = vld [vmem:[#allocation5 + $0x48] sm:$0xff]
    %v69 = vld [vmem:[#allocation5 + $0x50] sm:$0xff]
    %v70 = vld [vmem:[#allocation5 + $0x58] sm:$0xff]
    %v71 = vld [vmem:[#allocation5 + $0x60] sm:$0xff]
    %v72 = vld [vmem:[#allocation5 + $0x68] sm:$0xff]
    %v73 = vld [vmem:[#allocation5 + $0x70] sm:$0xff]
    %v74 = vld [vmem:[#allocation5 + $0x78] sm:$0xff]
    %v75 = vld [vmem:[#allocation5 + $0x80] sm:$0xff]
    %v76 = vld [vmem:[#allocation5 + $0x88] sm:$0xff]
    %v77 = vld [vmem:[#allocation5 + $0x90] sm:$0xff]
    %v78 = vld [vmem:[#allocation5 + $0x98] sm:$0xff]
    %v79 = vld [vmem:[#allocation5 + $0xa0] sm:$0xff]
    %v80 = vld [vmem:[#allocation5 + $0xa8] sm:$0xff]
    %v81 = vld [vmem:[#allocation5 + $0xb0] sm:$0xff]
    %v82 = vld [vmem:[#allocation5 + $0xb8] sm:$0xff]
    %v83 = vld [vmem:[#allocation5 + $0xc0] sm:$0xff]
    %v84 = vld [vmem:[#allocation5 + $0xc8] sm:$0xff]
    %v85 = vld [vmem:[#allocation5 + $0xd0] sm:$0xff]
    %v86 = vld [vmem:[#allocation5 + $0xd8] sm:$0xff]
    %v87 = vld [vmem:[#allocation5 + $0xe0] sm:$0xff]
    %v88 = vld [vmem:[#allocation5 + $0xe8] sm:$0xff]
    %v89 = vld [vmem:[#allocation5 + $0xf0] sm:$0xff]
    %v90 = vld [vmem:[#allocation5 + $0xf8] sm:$0xff]
    %v91 = vld [vmem:[#allocation5 + $0x100] sm:$0xff]
    %v92 = vld [vmem:[#allocation5 + $0x108] sm:$0xff]
    %v93 = vld [vmem:[#allocation5 + $0x110] sm:$0xff]
    %v94 = vld [vmem:[#allocation5 + $0x118] sm:$0xff]
    %v95 = vld [vmem:[#allocation5 + $0x120] sm:$0xff]
    %v96 = vld [vmem:[#allocation5 + $0x128] sm:$0xff]
    %v97 = vld [vmem:[#allocation5 + $0x130] sm:$0xff]
    %v98 = vld [vmem:[#allocation5 + $0x138] sm:$0xff]
    %v99 = vld [vmem:[#allocation5 + $0x140] sm:$0xff]
    %v100 = vld [vmem:[#allocation5 + $0x148] sm:$0xff]
    %v101 = vld [vmem:[#allocation5 + $0x150] sm:$0xff]
    %v102 = vld [vmem:[#allocation5 + $0x158] sm:$0xff]
    %v103 = vld [vmem:[#allocation5 + $0x160] sm:$0xff]
    %v104 = vld [vmem:[#allocation5 + $0x168] sm:$0xff]
    %v105 = vld [vmem:[#allocation5 + $0x170] sm:$0xff]
    %v106 = vld [vmem:[#allocation5 + $0x178] sm:$0xff]
    %v107 = vld [vmem:[#allocation5 + $0x180] sm:$0xff]
    %v108 = vld [vmem:[#allocation5 + $0x188] sm:$0xff]
    %v109 = vld [vmem:[#allocation5 + $0x190] sm:$0xff]
    %v110 = vld [vmem:[#allocation5 + $0x198] sm:$0xff]
    %v111 = vld [vmem:[#allocation5 + $0x1a0] sm:$0xff]
    %v112 = vld [vmem:[#allocation5 + $0x1a8] sm:$0xff]
    %v113 = vld [vmem:[#allocation5 + $0x1b0] sm:$0xff]
    %v114 = vld [vmem:[#allocation5 + $0x1b8] sm:$0xff]
    %v115 = vld [vmem:[#allocation5 + $0x1c0] sm:$0xff]
    %v116 = vld [vmem:[#allocation5 + $0x1c8] sm:$0xff]
    %v117 = vld [vmem:[#allocation5 + $0x1d0] sm:$0xff]
    %v118 = vld [vmem:[#allocation5 + $0x1d8] sm:$0xff]
    %v119 = vld [vmem:[#allocation5 + $0x1e0] sm:$0xff]
    %v120 = vld [vmem:[#allocation5 + $0x1e8] sm:$0xff]
    %v121 = vld [vmem:[#allocation5 + $0x1f0] sm:$0xff]
    %v122 = vld [vmem:[#allocation5 + $0x1f8] sm:$0xff]
    %v123 = vld [vmem:[#allocation5 + $0x200] sm:$0xff]
    %v124 = vld [vmem:[#allocation5 + $0x208] sm:$0xff]
    %v125 = vld [vmem:[#allocation5 + $0x210] sm:$0xff]
    %v126 = vld [vmem:[#allocation5 + $0x218] sm:$0xff]
    %v127 = vld [vmem:[#allocation5 + $0x220] sm:$0xff]
    %v128 = vld [vmem:[#allocation5 + $0x228] sm:$0xff]
    %v129 = vld [vmem:[#allocation5 + $0x230] sm:$0xff]
    %v130 = vld [vmem:[#allocation5 + $0x238] sm:$0xff]
    %v131 = vld [vmem:[#allocation5 + $0x240] sm:$0xff]
    %v132 = vld [vmem:[#allocation5 + $0x248] sm:$0xff]
    %v133 = vld [vmem:[#allocation5 + $0x250] sm:$0xff]
    %v134 = vld [vmem:[#allocation5 + $0x258] sm:$0xff]
    %v135 = vld [vmem:[#allocation5 + $0x260] sm:$0xff]
    %v136 = vld [vmem:[#allocation5 + $0x268] sm:$0xff]
    %v137 = vld [vmem:[#allocation5 + $0x270] sm:$0xff]
    %v138 = vld [vmem:[#allocation5 + $0x278] sm:$0xff]
    %v139 = vld [vmem:[#allocation5 + $0x280] sm:$0xff]
    %v140 = vld [vmem:[#allocation5 + $0x288] sm:$0xff]
    %v141 = vld [vmem:[#allocation5 + $0x290] sm:$0xff]
    %v142 = vld [vmem:[#allocation5 + $0x298] sm:$0xff]
    %v143 = vld [vmem:[#allocation5 + $0x2a0] sm:$0xff]
    %v144 = vld [vmem:[#allocation5 + $0x2a8] sm:$0xff]
    %v145 = vld [vmem:[#allocation5 + $0x2b0] sm:$0xff]
    %v146 = vld [vmem:[#allocation5 + $0x2b8] sm:$0xff]
    %v147 = vld [vmem:[#allocation5 + $0x2c0] sm:$0xff]
    %v148 = vld [vmem:[#allocation5 + $0x2c8] sm:$0xff]
    %v149 = vld [vmem:[#allocation5 + $0x2d0] sm:$0xff]
    %v150 = vld [vmem:[#allocation5 + $0x2d8] sm:$0xff]
    %v151 = vld [vmem:[#allocation5 + $0x2e0] sm:$0xff]
    %v152 = vld [vmem:[#allocation5 + $0x2e8] sm:$0xff]
    %v153 = vld [vmem:[#allocation5 + $0x2f0] sm:$0xff]
    %v154 = vld [vmem:[#allocation5 + $0x2f8] sm:$0xff]
    %v155 = vld [vmem:[#allocation5 + $0x300] sm:$0xff]
    %v156 = vld [vmem:[#allocation5 + $0x308] sm:$0xff]
    %v157 = vld [vmem:[#allocation5 + $0x310] sm:$0xff]
    %v158 = vld [vmem:[#allocation5 + $0x318] sm:$0xff]
    %v159 = vld [vmem:[#allocation5 + $0x320] sm:$0xff]
    %v160 = vld [vmem:[#allocation5 + $0x328] sm:$0xff]
    %v161 = vld [vmem:[#allocation5 + $0x330] sm:$0xff]
    %v162 = vld [vmem:[#allocation5 + $0x338] sm:$0xff]
    %v163 = vld [vmem:[#allocation5 + $0x340] sm:$0xff]
    %v164 = vld [vmem:[#allocation5 + $0x348] sm:$0xff]
    %v165 = vld [vmem:[#allocation5 + $0x350] sm:$0xff]
    %v166 = vld [vmem:[#allocation5 + $0x358] sm:$0xff]
    %v167 = vld [vmem:[#allocation5 + $0x360] sm:$0xff]
    %v168 = vld [vmem:[#allocation5 + $0x368] sm:$0xff]
    %v169 = vld [vmem:[#allocation5 + $0x370] sm:$0xff]
    %v170 = vld [vmem:[#allocation5 + $0x378] sm:$0xff]
    %v171 = vld [vmem:[#allocation5 + $0x380] sm:$0xff]
    %v172 = vld [vmem:[#allocation5 + $0x388] sm:$0xff]
    %v173 = vld [vmem:[#allocation5 + $0x390] sm:$0xff]
    %v174 = vld [vmem:[#allocation5 + $0x398] sm:$0xff]
    %v175 = vld [vmem:[#allocation5 + $0x3a0] sm:$0xff]
    %v176 = vld [vmem:[#allocation5 + $0x3a8] sm:$0xff]
    %v177 = vld [vmem:[#allocation5 + $0x3b0] sm:$0xff]
    %v178 = vld [vmem:[#allocation5 + $0x3b8] sm:$0xff]
    %v179 = vld [vmem:[#allocation5 + $0x3c0] sm:$0xff]
    %v180 = vld [vmem:[#allocation5 + $0x3c8] sm:$0xff]
    %v181 = vld [vmem:[#allocation5 + $0x3d0] sm:$0xff]
    %v182 = vld [vmem:[#allocation5 + $0x3d8] sm:$0xff]
    %v183 = vld [vmem:[#allocation5 + $0x3e0] sm:$0xff]
    %v184 = vld [vmem:[#allocation5 + $0x3e8] sm:$0xff]
    %v185 = vld [vmem:[#allocation5 + $0x3f0] sm:$0xff]
    %v186 = vld [vmem:[#allocation5 + $0x3f8] sm:$0xff]
    %v187 = vld [vmem:[%s2] sm:$0xf]
    %v189 = vlaneseq
    %v190 = vshrl.u32 %v189, 7
    %v191 = vsub.s32 0, %v190
    %v192 = vrot.slane %v187, %v191
    %v193 = vlaneseq
    %v194 = vshrl.u32 %v193, 7
    %v195 = vsub.s32 1, %v194
    %v196 = vrot.slane %v187, %v195
    %v197 = vlaneseq
    %v198 = vshrl.u32 %v197, 7
    %v199 = vsub.s32 2, %v198
    %v200 = vrot.slane %v187, %v199
    %v201 = vlaneseq
    %v202 = vshrl.u32 %v201, 7
    %v203 = vsub.s32 3, %v202
    %v204 = vrot.slane %v187, %v203
    %209 = vmatprep.subr.mxu0 %v60
    %210 = vmatpush1.msra.mxu0 %v59
    %211 = vmatprep.subr.mxu0 %v64
    %212 = vmatpush1.msra.mxu0 %v63
    %213 = vmatprep.subr.mxu0 %v68
    %214 = vmatpush1.msra.mxu0 %v67
    %215 = vmatprep.subr.mxu0 %v72
    %216 = vmatpush1.msra.mxu0 %v71
    %217 = vmatprep.subr.mxu0 %v76
    %218 = vmatpush1.msra.mxu0 %v75
    %219 = vmatprep.subr.mxu0 %v80
    %220 = vmatpush1.msra.mxu0 %v79
    %221 = vmatprep.subr.mxu0 %v84
    %222 = vmatpush1.msra.mxu0 %v83
    %223 = vmatprep.subr.mxu0 %v88
    %224 = vmatpush1.msra.mxu0 %v87
    %225 = vmatprep.subr.mxu0 %v92
    %226 = vmatpush1.msra.mxu0 %v91
    %227 = vmatprep.subr.mxu0 %v96
    %228 = vmatpush1.msra.mxu0 %v95
    %229 = vmatprep.subr.mxu0 %v100
    %230 = vmatpush1.msra.mxu0 %v99
    %231 = vmatprep.subr.mxu0 %v104
    %232 = vmatpush1.msra.mxu0 %v103
    %233 = vmatprep.subr.mxu0 %v108
    %234 = vmatpush1.msra.mxu0 %v107
    %235 = vmatprep.subr.mxu0 %v112
    %236 = vmatpush1.msra.mxu0 %v111
    %237 = vmatprep.subr.mxu0 %v116
    %238 = vmatpush1.msra.mxu0 %v115
    %239 = vmatprep.subr.mxu0 %v120
    %240 = vmatpush1.msra.mxu0 %v119
    %241 = vmatprep.subr.mxu0 %v124
    %242 = vmatpush1.msra.mxu0 %v123
    %243 = vmatprep.subr.mxu0 %v128
    %244 = vmatpush1.msra.mxu0 %v127
    %245 = vmatprep.subr.mxu0 %v132
    %246 = vmatpush1.msra.mxu0 %v131
    %247 = vmatprep.subr.mxu0 %v136
    %248 = vmatpush1.msra.mxu0 %v135
    %249 = vmatprep.subr.mxu0 %v140
    %250 = vmatpush1.msra.mxu0 %v139
    %251 = vmatprep.subr.mxu0 %v144
    %252 = vmatpush1.msra.mxu0 %v143
    %253 = vmatprep.subr.mxu0 %v148
    %254 = vmatpush1.msra.mxu0 %v147
    %255 = vmatprep.subr.mxu0 %v152
    %256 = vmatpush1.msra.mxu0 %v151
    %257 = vmatprep.subr.mxu0 %v156
    %258 = vmatpush1.msra.mxu0 %v155
    %259 = vmatprep.subr.mxu0 %v160
    %260 = vmatpush1.msra.mxu0 %v159
    %261 = vmatprep.subr.mxu0 %v164
    %262 = vmatpush1.msra.mxu0 %v163
    %263 = vmatprep.subr.mxu0 %v168
    %264 = vmatpush1.msra.mxu0 %v167
    %265 = vmatprep.subr.mxu0 %v172
    %266 = vmatpush1.msra.mxu0 %v171
    %267 = vmatprep.subr.mxu0 %v176
    %268 = vmatpush1.msra.mxu0 %v175
    %269 = vmatprep.subr.mxu0 %v180
    %270 = vmatpush1.msra.mxu0 %v179
    %271 = vmatprep.subr.mxu0 %v184
    %272 = vmatpush1.msra.mxu0 %v183
    %273 = vmatprep.mubr.f32.mxu0 %v58
    %274 = vmatmul.mubr.f32.gmra.mrb[0].mxu0 %v57
    %v275 = vpop.f32.mrb[0].mxu0
    %v276 = vadd.f32 %v192, %v275
    %v277 = vpop.f32.mrb[0].mxu0
    %v278 = vadd.f32 %v196, %v277
    %279 = vdwg.mxu0
    %280 = vmatprep.subr.mxu0 %v62
    %281 = vmatpush1.msra.mxu0 %v61
    %282 = vmatprep.subr.mxu0 %v66
    %283 = vmatpush1.msra.mxu0 %v65
    %284 = vmatprep.subr.mxu0 %v70
    %285 = vmatpush1.msra.mxu0 %v69
    %286 = vmatprep.subr.mxu0 %v74
    %287 = vmatpush1.msra.mxu0 %v73
    %288 = vmatprep.subr.mxu0 %v78
    %289 = vmatpush1.msra.mxu0 %v77
    %290 = vmatprep.subr.mxu0 %v82
    %291 = vmatpush1.msra.mxu0 %v81
    %292 = vmatprep.subr.mxu0 %v86
    %293 = vmatpush1.msra.mxu0 %v85
    %294 = vmatprep.subr.mxu0 %v90
    %295 = vmatpush1.msra.mxu0 %v89
    %296 = vmatprep.subr.mxu0 %v94
    %297 = vmatpush1.msra.mxu0 %v93
    %298 = vmatprep.subr.mxu0 %v98
    %299 = vmatpush1.msra.mxu0 %v97
    %300 = vmatprep.subr.mxu0 %v102
    %301 = vmatpush1.msra.mxu0 %v101
    %302 = vmatprep.subr.mxu0 %v106
    %303 = vmatpush1.msra.mxu0 %v105
    %304 = vmatprep.subr.mxu0 %v110
    %305 = vmatpush1.msra.mxu0 %v109
    %306 = vmatprep.subr.mxu0 %v114
    %307 = vmatpush1.msra.mxu0 %v113
    %308 = vmatprep.subr.mxu0 %v118
    %309 = vmatpush1.msra.mxu0 %v117
    %310 = vmatprep.subr.mxu0 %v122
    %311 = vmatpush1.msra.mxu0 %v121
    %312 = vmatprep.subr.mxu0 %v126
    %313 = vmatpush1.msra.mxu0 %v125
    %314 = vmatprep.subr.mxu0 %v130
    %315 = vmatpush1.msra.mxu0 %v129
    %316 = vmatprep.subr.mxu0 %v134
    %317 = vmatpush1.msra.mxu0 %v133
    %318 = vmatprep.subr.mxu0 %v138
    %319 = vmatpush1.msra.mxu0 %v137
    %320 = vmatprep.subr.mxu0 %v142
    %321 = vmatpush1.msra.mxu0 %v141
    %322 = vmatprep.subr.mxu0 %v146
    %323 = vmatpush1.msra.mxu0 %v145
    %324 = vmatprep.subr.mxu0 %v150
    %325 = vmatpush1.msra.mxu0 %v149
    %326 = vmatprep.subr.mxu0 %v154
    %327 = vmatpush1.msra.mxu0 %v153
    %328 = vmatprep.subr.mxu0 %v158
    %329 = vmatpush1.msra.mxu0 %v157
    %330 = vmatprep.subr.mxu0 %v162
    %331 = vmatpush1.msra.mxu0 %v161
    %332 = vmatprep.subr.mxu0 %v166
    %333 = vmatpush1.msra.mxu0 %v165
    %334 = vmatprep.subr.mxu0 %v170
    %335 = vmatpush1.msra.mxu0 %v169
    %336 = vmatprep.subr.mxu0 %v174
    %337 = vmatpush1.msra.mxu0 %v173
    %338 = vmatprep.subr.mxu0 %v178
    %339 = vmatpush1.msra.mxu0 %v177
    %340 = vmatprep.subr.mxu0 %v182
    %341 = vmatpush1.msra.mxu0 %v181
    %342 = vmatprep.subr.mxu0 %v186
    %343 = vmatpush1.msra.mxu0 %v185
    %344 = vmatprep.mubr.f32.mxu0 %v58
    %345 = vmatmul.mubr.f32.gmra.mrb[0].mxu0 %v57
    %v346 = vpop.f32.mrb[0].mxu0
    %v347 = vadd.f32 %v200, %v346
    %v348 = vpop.f32.mrb[0].mxu0
    %v349 = vadd.f32 %v204, %v348
    %350 = vdwg.mxu0
    %v351 = vmul.f32 %v276, %v276
    %v352 = vmul.f32 %v278, %v278
    %v353 = vmul.f32 %v347, %v347
    %v354 = vmul.f32 %v349, %v349
    %v355 = vadd.f32 %v351, %v352
    %v356 = vadd.f32 %v355, %v353
    %v357 = vadd.f32 %v356, %v354
    %358 = vadd.xlane.f32.xlu0 %v357
    %v359 = vpop.xlane.xlu0 %358
    %v360 = vmax.f32 %v359, 1e-24
    %v361 = vrsqrt.pop %v360
    %v362 = vmul.f32 %v361, 20.0
    %v363 = vmul.f32 %v276, %v362
    %v364 = vmul.f32 %v278, %v362
    %v365 = vmul.f32 %v347, %v362
    %v366 = vmul.f32 %v349, %v362
    %v367 = vld [vmem:[#allocation7] sm:$0xff]
    %v368 = vld [vmem:[#allocation7 + $0x8] sm:$0xff]
    %v369 = vld [vmem:[#allocation7 + $0x10] sm:$0xff]
    %v370 = vld [vmem:[#allocation7 + $0x18] sm:$0xff]
    %v371 = vld [vmem:[#allocation7 + $0x20] sm:$0xff]
    %v372 = vld [vmem:[#allocation7 + $0x28] sm:$0xff]
    %v373 = vld [vmem:[#allocation7 + $0x30] sm:$0xff]
    %v374 = vld [vmem:[#allocation7 + $0x38] sm:$0xff]
    %v375 = vld [vmem:[#allocation7 + $0x40] sm:$0xff]
    %v376 = vld [vmem:[#allocation7 + $0x48] sm:$0xff]
    %v377 = vld [vmem:[#allocation7 + $0x50] sm:$0xff]
    %v378 = vld [vmem:[#allocation7 + $0x58] sm:$0xff]
    %v379 = vld [vmem:[#allocation7 + $0x60] sm:$0xff]
    %v380 = vld [vmem:[#allocation7 + $0x68] sm:$0xff]
    %v381 = vld [vmem:[#allocation7 + $0x70] sm:$0xff]
    %v382 = vld [vmem:[#allocation7 + $0x78] sm:$0xff]
    %v383 = vld [vmem:[#allocation7 + $0x80] sm:$0xff]
    %v384 = vld [vmem:[#allocation7 + $0x88] sm:$0xff]
    %v385 = vld [vmem:[#allocation7 + $0x90] sm:$0xff]
    %v386 = vld [vmem:[#allocation7 + $0x98] sm:$0xff]
    %v387 = vld [vmem:[#allocation7 + $0xa0] sm:$0xff]
    %v388 = vld [vmem:[#allocation7 + $0xa8] sm:$0xff]
    %v389 = vld [vmem:[#allocation7 + $0xb0] sm:$0xff]
    %v390 = vld [vmem:[#allocation7 + $0xb8] sm:$0xff]
    %v391 = vld [vmem:[#allocation7 + $0xc0] sm:$0xff]
    %v392 = vld [vmem:[#allocation7 + $0xc8] sm:$0xff]
    %v393 = vld [vmem:[#allocation7 + $0xd0] sm:$0xff]
    %v394 = vld [vmem:[#allocation7 + $0xd8] sm:$0xff]
    %v395 = vld [vmem:[#allocation7 + $0xe0] sm:$0xff]
    %v396 = vld [vmem:[#allocation7 + $0xe8] sm:$0xff]
    %v397 = vld [vmem:[#allocation7 + $0xf0] sm:$0xff]
    %v398 = vld [vmem:[#allocation7 + $0xf8] sm:$0xff]
    %v399 = vld [vmem:[#allocation7 + $0x100] sm:$0xff]
    %v400 = vld [vmem:[#allocation7 + $0x108] sm:$0xff]
    %v401 = vld [vmem:[#allocation7 + $0x110] sm:$0xff]
    %v402 = vld [vmem:[#allocation7 + $0x118] sm:$0xff]
    %v403 = vld [vmem:[#allocation7 + $0x120] sm:$0xff]
    %v404 = vld [vmem:[#allocation7 + $0x128] sm:$0xff]
    %v405 = vld [vmem:[#allocation7 + $0x130] sm:$0xff]
    %v406 = vld [vmem:[#allocation7 + $0x138] sm:$0xff]
    %v407 = vld [vmem:[#allocation7 + $0x140] sm:$0xff]
    %v408 = vld [vmem:[#allocation7 + $0x148] sm:$0xff]
    %v409 = vld [vmem:[#allocation7 + $0x150] sm:$0xff]
    %v410 = vld [vmem:[#allocation7 + $0x158] sm:$0xff]
    %v411 = vld [vmem:[#allocation7 + $0x160] sm:$0xff]
    %v412 = vld [vmem:[#allocation7 + $0x168] sm:$0xff]
    %v413 = vld [vmem:[#allocation7 + $0x170] sm:$0xff]
    %v414 = vld [vmem:[#allocation7 + $0x178] sm:$0xff]
    %v415 = vld [vmem:[#allocation7 + $0x180] sm:$0xff]
    %v416 = vld [vmem:[#allocation7 + $0x188] sm:$0xff]
    %v417 = vld [vmem:[#allocation7 + $0x190] sm:$0xff]
    %v418 = vld [vmem:[#allocation7 + $0x198] sm:$0xff]
    %v419 = vld [vmem:[#allocation7 + $0x1a0] sm:$0xff]
    %v420 = vld [vmem:[#allocation7 + $0x1a8] sm:$0xff]
    %v421 = vld [vmem:[#allocation7 + $0x1b0] sm:$0xff]
    %v422 = vld [vmem:[#allocation7 + $0x1b8] sm:$0xff]
    %v423 = vld [vmem:[#allocation7 + $0x1c0] sm:$0xff]
    %v424 = vld [vmem:[#allocation7 + $0x1c8] sm:$0xff]
    %v425 = vld [vmem:[#allocation7 + $0x1d0] sm:$0xff]
    %v426 = vld [vmem:[#allocation7 + $0x1d8] sm:$0xff]
    %v427 = vld [vmem:[#allocation7 + $0x1e0] sm:$0xff]
    %v428 = vld [vmem:[#allocation7 + $0x1e8] sm:$0xff]
    %v429 = vld [vmem:[#allocation7 + $0x1f0] sm:$0xff]
    %v430 = vld [vmem:[#allocation7 + $0x1f8] sm:$0xff]
    %431 = vmatprep.subr.mxu0 0.0
    %432 = vmatpush1.msra.mxu0 %v367
    %433 = vmatprep.subr.mxu0 0.0
    %434 = vmatpush1.msra.mxu0 %v368
    %435 = vmatprep.subr.mxu0 0.0
    %436 = vmatpush1.msra.mxu0 %v369
    %437 = vmatprep.subr.mxu0 0.0
    %438 = vmatpush1.msra.mxu0 %v370
    %439 = vmatprep.subr.mxu0 0.0
    %440 = vmatpush1.msra.mxu0 %v371
    %441 = vmatprep.subr.mxu0 0.0
    %442 = vmatpush1.msra.mxu0 %v372
    %443 = vmatprep.subr.mxu0 0.0
    %444 = vmatpush1.msra.mxu0 %v373
    %445 = vmatprep.subr.mxu0 0.0
    %446 = vmatpush1.msra.mxu0 %v374
    %447 = vmatprep.subr.mxu0 0.0
    %448 = vmatpush1.msra.mxu0 %v375
    %449 = vmatprep.subr.mxu0 0.0
    %450 = vmatpush1.msra.mxu0 %v376
    %451 = vmatprep.subr.mxu0 0.0
    %452 = vmatpush1.msra.mxu0 %v377
    %453 = vmatprep.subr.mxu0 0.0
    %454 = vmatpush1.msra.mxu0 %v378
    %455 = vmatprep.subr.mxu0 0.0
    %456 = vmatpush1.msra.mxu0 %v379
    %457 = vmatprep.subr.mxu0 0.0
    %458 = vmatpush1.msra.mxu0 %v380
    %459 = vmatprep.subr.mxu0 0.0
    %460 = vmatpush1.msra.mxu0 %v381
    %461 = vmatprep.subr.mxu0 0.0
    %462 = vmatpush1.msra.mxu0 %v382
    %463 = vmatprep.subr.mxu0 0.0
    %464 = vmatpush1.msra.mxu0 %v383
    %465 = vmatprep.subr.mxu0 0.0
    %466 = vmatpush1.msra.mxu0 %v384
    %467 = vmatprep.subr.mxu0 0.0
    %468 = vmatpush1.msra.mxu0 %v385
    %469 = vmatprep.subr.mxu0 0.0
    %470 = vmatpush1.msra.mxu0 %v386
    %471 = vmatprep.subr.mxu0 0.0
    %472 = vmatpush1.msra.mxu0 %v387
    %473 = vmatprep.subr.mxu0 0.0
    %474 = vmatpush1.msra.mxu0 %v388
    %475 = vmatprep.subr.mxu0 0.0
    %476 = vmatpush1.msra.mxu0 %v389
    %477 = vmatprep.subr.mxu0 0.0
    %478 = vmatpush1.msra.mxu0 %v390
    %479 = vmatprep.subr.mxu0 0.0
    %480 = vmatpush1.msra.mxu0 %v391
    %481 = vmatprep.subr.mxu0 0.0
    %482 = vmatpush1.msra.mxu0 %v392
    %483 = vmatprep.subr.mxu0 0.0
    %484 = vmatpush1.msra.mxu0 %v393
    %485 = vmatprep.subr.mxu0 0.0
    %486 = vmatpush1.msra.mxu0 %v394
    %487 = vmatprep.subr.mxu0 0.0
    %488 = vmatpush1.msra.mxu0 %v395
    %489 = vmatprep.subr.mxu0 0.0
    %490 = vmatpush1.msra.mxu0 %v396
    %491 = vmatprep.subr.mxu0 0.0
    %492 = vmatpush1.msra.mxu0 %v397
    %493 = vmatprep.subr.mxu0 0.0
    %494 = vmatpush1.msra.mxu0 %v398
    %495 = vmatprep.mubr.f32.mxu0 %v364
    %496 = vmatmul.mubr.f32.gmra.mrb[0].mxu0 %v363
    %v497 = vpop.f32.mrb[0].mxu0
    %v498 = vadd.f32 0.0, %v497
    %v499 = vpop.f32.mrb[0].mxu0
    %500 = vdwg.mxu0
    %501 = vmatprep.subr.mxu0 0.0
    %502 = vmatpush1.msra.mxu0 %v399
    %503 = vmatprep.subr.mxu0 0.0
    %504 = vmatpush1.msra.mxu0 %v400
    %505 = vmatprep.subr.mxu0 0.0
    %506 = vmatpush1.msra.mxu0 %v401
    %507 = vmatprep.subr.mxu0 0.0
    %508 = vmatpush1.msra.mxu0 %v402
    %509 = vmatprep.subr.mxu0 0.0
    %510 = vmatpush1.msra.mxu0 %v403
    %511 = vmatprep.subr.mxu0 0.0
    %512 = vmatpush1.msra.mxu0 %v404
    %513 = vmatprep.subr.mxu0 0.0
    %514 = vmatpush1.msra.mxu0 %v405
    %515 = vmatprep.subr.mxu0 0.0
    %516 = vmatpush1.msra.mxu0 %v406
    %517 = vmatprep.subr.mxu0 0.0
    %518 = vmatpush1.msra.mxu0 %v407
    %519 = vmatprep.subr.mxu0 0.0
    %520 = vmatpush1.msra.mxu0 %v408
    %521 = vmatprep.subr.mxu0 0.0
    %522 = vmatpush1.msra.mxu0 %v409
    %523 = vmatprep.subr.mxu0 0.0
    %524 = vmatpush1.msra.mxu0 %v410
    %525 = vmatprep.subr.mxu0 0.0
    %526 = vmatpush1.msra.mxu0 %v411
    %527 = vmatprep.subr.mxu0 0.0
    %528 = vmatpush1.msra.mxu0 %v412
    %529 = vmatprep.subr.mxu0 0.0
    %530 = vmatpush1.msra.mxu0 %v413
    %531 = vmatprep.subr.mxu0 0.0
    %532 = vmatpush1.msra.mxu0 %v414
    %533 = vmatprep.subr.mxu0 0.0
    %534 = vmatpush1.msra.mxu0 %v415
    %535 = vmatprep.subr.mxu0 0.0
    %536 = vmatpush1.msra.mxu0 %v416
    %537 = vmatprep.subr.mxu0 0.0
    %538 = vmatpush1.msra.mxu0 %v417
    %539 = vmatprep.subr.mxu0 0.0
    %540 = vmatpush1.msra.mxu0 %v418
    %541 = vmatprep.subr.mxu0 0.0
    %542 = vmatpush1.msra.mxu0 %v419
    %543 = vmatprep.subr.mxu0 0.0
    %544 = vmatpush1.msra.mxu0 %v420
    %545 = vmatprep.subr.mxu0 0.0
    %546 = vmatpush1.msra.mxu0 %v421
    %547 = vmatprep.subr.mxu0 0.0
    %548 = vmatpush1.msra.mxu0 %v422
    %549 = vmatprep.subr.mxu0 0.0
    %550 = vmatpush1.msra.mxu0 %v423
    %551 = vmatprep.subr.mxu0 0.0
    %552 = vmatpush1.msra.mxu0 %v424
    %553 = vmatprep.subr.mxu0 0.0
    %554 = vmatpush1.msra.mxu0 %v425
    %555 = vmatprep.subr.mxu0 0.0
    %556 = vmatpush1.msra.mxu0 %v426
    %557 = vmatprep.subr.mxu0 0.0
    %558 = vmatpush1.msra.mxu0 %v427
    %559 = vmatprep.subr.mxu0 0.0
    %560 = vmatpush1.msra.mxu0 %v428
    %561 = vmatprep.subr.mxu0 0.0
    %562 = vmatpush1.msra.mxu0 %v429
    %563 = vmatprep.subr.mxu0 0.0
    %564 = vmatpush1.msra.mxu0 %v430
    %565 = vmatprep.mubr.f32.mxu0 %v366
    %566 = vmatmul.mubr.f32.gmra.mrb[0].mxu0 %v365
    %v567 = vpop.f32.mrb[0].mxu0
    %v568 = vadd.f32 %v498, %v567
    %v569 = vpop.f32.mrb[0].mxu0
    %570 = vdwg.mxu0
    %571 = vst [vmem:[#allocation8] sm:$0xff] %v568
    // Predicated region
    $region30: #{tpu_custom_call.1} parent=1 // pred_check
      _
    $region31: #{tpu_custom_call.1} parent=1 // pred_check_branch
      %573 = sbr.rel (0) target = $region33
    $region32: #{tpu_custom_call.1} parent=1 // pred_region
      %s575 = ssub.s32 128, 128
      %576 = vsyncadd [#allocation4], %s575
      %s578 = sshll.u32 [#allocation8], 4
      %s579 = int_to_ptr.vmem [resolvable:$true] %s578
      %581 = dma.vmem_to_hbm [thread:$0]  %s579, 128, %s4, [#allocation4]
    $region33: #{tpu_custom_call.1} parent=1 // pred_fallthru
      _
    // Predicated region
    $region34: #{tpu_custom_call.1} parent=1 // pred_check
      _
    $region35: #{tpu_custom_call.1} parent=1 // pred_check_branch
      %583 = sbr.rel (0) target = $region37
    $region36: #{tpu_custom_call.1} parent=1 // pred_region
      %584 = dma.done [#allocation4], 128
    $region37: #{tpu_custom_call.1} parent=1 // pred_fallthru
      _
    %585 = vsyncpa [#allocation3], 1
    %586 = vsyncpa [#allocation6], 1
    %587 = vsyncpa [#allocation4], 1

</llo_original>
